<compile_context>
chip_gen: v5e
topology: v5e:2x2
jax: 0.10.0
libtpu: 0.0.40
codegen_flags: <defaults>
</compile_context>

<pallas_src>
import functools

import jax
import jax.numpy as jnp
from jax.experimental import pallas as pl
from jax.experimental.pallas import tpu as pltpu


def _round_up(x, m):
    return (x + m - 1) // m * m


# ---------------------------------------------------------------------------
# Pallas kernel
# ---------------------------------------------------------------------------

def _rmsnorm_kernel(x_ref, o_ref, *, scale):
    """SimpleRMSNorm on a (TILE_T, D) tile: x / max(||x||_2, 1e-12) * sqrt(D)."""
    x = x_ref[...].astype(jnp.float32)                     # (TILE_T, D) f32
    ss = jnp.sum(x * x, axis=-1, keepdims=True)            # (TILE_T, 1), XLU
    # Clamp in the squared domain: sqrt(1e-24) == F.normalize's eps=1e-12 on
    # the norm.  rsqrt runs on the EUP (separate VLIW slot); fold sqrt(dim)
    # into the per-row scalar so the wide axis sees one multiply.
    inv = jax.lax.rsqrt(jnp.maximum(ss, 1e-24)) * scale    # (TILE_T, 1)
    o_ref[...] = (x * inv).astype(o_ref.dtype)


# ---------------------------------------------------------------------------
# Wrapper
# ---------------------------------------------------------------------------

def simple_rms_norm(x, *, target_block_bytes=2 << 20):
    """Apply SimpleRMSNorm over the last axis of `x` (any leading shape)."""
    orig_shape = x.shape
    dim = orig_shape[-1]
    x2d = x.reshape(-1, dim)
    t = x2d.shape[0]

    itemsize = jnp.dtype(x2d.dtype).itemsize
    # Sublane packing multiple: f32 -> 8, bf16/f16 -> 16, 8-bit -> 32.
    sublane = max(8, 32 // itemsize)

    # Row tile from a byte budget (~2 MiB per block), rounded to the sublane
    # multiple and never larger than the (sublane-rounded) row count.
    row_bytes = max(1, dim * itemsize)
    tile = max(sublane, min(target_block_bytes // row_bytes, 4096))
    tile = (tile // sublane) * sublane
    tile = min(tile, _round_up(t, sublane))

    grid = (pl.cdiv(t, tile),)

    # VMEM budget: in + out, double buffered, plus slack; keep well under the
    # v7x 64 MiB / v5e 16 MiB-default limits.
    block_bytes = tile * dim * itemsize
    vmem_limit = int(min(24 << 20, max(4 * block_bytes + (1 << 20), 4 << 20)))

    out = pl.pallas_call(
        functools.partial(_rmsnorm_kernel, scale=float(dim) ** 0.5),
        out_shape=jax.ShapeDtypeStruct((t, dim), x2d.dtype),
        grid=grid,
        in_specs=[pl.BlockSpec((tile, dim), lambda i: (i, 0))],
        out_specs=pl.BlockSpec((tile, dim), lambda i: (i, 0)),
        compiler_params=pltpu.CompilerParams(
            dimension_semantics=("parallel",),
            vmem_limit_bytes=vmem_limit),
    )(x2d)

    return out.reshape(orig_shape)


# ---------------------------------------------------------------------------
# Reference (plain JAX) for correctness check
# ---------------------------------------------------------------------------

def _simple_rms_norm_ref(x):
    dim = x.shape[-1]
    x = x.astype(jnp.float32)
    nrm = jnp.sqrt(jnp.sum(x * x, axis=-1, keepdims=True))
    return x / jnp.maximum(nrm, 1e-12) * (float(dim) ** 0.5)


# ---------------------------------------------------------------------------
# Main
# ---------------------------------------------------------------------------

if __name__ == "__main__":
    key = jax.random.PRNGKey(0)
    k0, k1, k2 = jax.random.split(key, 3)

    # Lane-dense f32 case: (batch=2, seq=8, dim=128) -> 16 rows x 128 lanes.
    x = jax.random.normal(k0, (2, 8, 128), jnp.float32)
    y = simple_rms_norm(x)
    jax.block_until_ready(y)
    assert y.shape == x.shape and y.dtype == x.dtype
    assert jnp.allclose(y, _simple_rms_norm_ref(x), atol=1e-5, rtol=1e-5)

    # Ragged case: row count not a multiple of the tile and a non-128 feature
    # dim (exercises the masked last block, no wrapper-side padding).
    x2 = jax.random.normal(k1, (2, 7, 96), jnp.float32)
    y2 = simple_rms_norm(x2)
    jax.block_until_ready(y2)
    assert y2.shape == x2.shape and y2.dtype == x2.dtype
    assert jnp.allclose(y2, _simple_rms_norm_ref(x2), atol=1e-5, rtol=1e-5)

    # Native bf16 case: HBM stays bf16 both ways, kernel computes in f32.
    x3 = jax.random.normal(k2, (4, 16, 256), jnp.float32).astype(jnp.bfloat16)
    y3 = simple_rms_norm(x3)
    jax.block_until_ready(y3)
    assert y3.shape == x3.shape and y3.dtype == jnp.bfloat16
    ref3 = _simple_rms_norm_ref(x3)
    assert jnp.allclose(y3.astype(jnp.float32), ref3, atol=3e-2, rtol=3e-2)

    print("KERNEL_OK")
</pallas_src>

<mosaic_0001>
module attributes {stable_mosaic.version = 11 : i64} {
  func.func @_rmsnorm_kernel(%arg0: i32, %arg1: memref<16x128xf32, #tpu.memory_space<vmem>>, %arg2: memref<16x128xf32, #tpu.memory_space<vmem>>) attributes {dimension_semantics = [#tpu.dimension_semantics<parallel>], iteration_bounds = array<i64: 1>, scalar_prefetch = 0 : i64, scratch_operands = 0 : i64, tpu.core_type = #tpu.core_type<tc>, window_params = [{transform_indices = @transform_0, window_bounds = array<i64: 16, 128>}, {transform_indices = @transform_1, window_bounds = array<i64: 16, 128>}]} {
    %c0 = arith.constant 0 : index
    %c0_0 = arith.constant 0 : index
    %0 = vector.load %arg1[%c0, %c0_0] : memref<16x128xf32, #tpu.memory_space<vmem>>, vector<16x128xf32>
    %1 = arith.mulf %0, %0 : vector<16x128xf32>
    %cst = arith.constant dense<0.000000e+00> : vector<16xf32>
    %2 = vector.multi_reduction <add>, %1, %cst [1] : vector<16x128xf32> to vector<16xf32>
    %3 = vector.shape_cast %2 : vector<16xf32> to vector<16x1xf32>
    %cst_1 = arith.constant 1.000000e-24 : f32
    %4 = vector.broadcast %cst_1 : f32 to vector<16x1xf32>
    %5 = arith.maximumf %3, %4 : vector<16x1xf32>
    %6 = math.rsqrt %5 : vector<16x1xf32>
    %cst_2 = arith.constant 11.3137083 : f32
    %7 = vector.broadcast %cst_2 : f32 to vector<16x1xf32>
    %8 = arith.mulf %6, %7 : vector<16x1xf32>
    %9 = vector.broadcast %8 : vector<16x1xf32> to vector<16x128xf32>
    %10 = arith.mulf %0, %9 : vector<16x128xf32>
    %c0_3 = arith.constant 0 : index
    %c0_4 = arith.constant 0 : index
    %11 = vector.load %arg2[%c0_3, %c0_4] : memref<16x128xf32, #tpu.memory_space<vmem>>, vector<16x128xf32>
    tpu.vector_store %arg2[%c0_3, %c0_4], %10 {strides = array<i32>} : memref<16x128xf32, #tpu.memory_space<vmem>>, vector<16x128xf32>,
    return
  }
  func.func @transform_0(%arg0: i32) -> (i32, i32) {
    %c0_i32 = arith.constant 0 : i32
    %c0_i32_0 = arith.constant 0 : i32
    return %arg0, %c0_i32 : i32, i32
  }
  func.func @transform_1(%arg0: i32) -> (i32, i32) {
    %c0_i32 = arith.constant 0 : i32
    %c0_i32_0 = arith.constant 0 : i32
    return %arg0, %c0_i32 : i32, i32
  }
}

</mosaic_0001>

<llo_original>
// kernel: tpu_custom_call.1
$region0: #{tpu_custom_call.1}
  #allocation0 [shape = 'u32[]', space=smem, size = 0x4, offset = 0x4, fixed_abs, tag = 'smem constant byte address 0x4 - core index']
  #allocation1 [shape = 'u32[72,128]{1,0:T(1,128)}', space=vmem, size = 0x9000, scoped, tag = 'internal scratch']
  %s0 = inlined_call_operand.hbm [shape: f32[16,128], index: 0, kind: input, shape index: {}]
  %s1 = inlined_call_operand.hbm [shape: f32[16,128], index: 1, kind: output, shape index: {}]
  %s2 = sld [smem:[#allocation0]]
  $region18: #{tpu_custom_call.1} parent=0
    _
  %s4 = ssub.s32 1, %s2
  %s5 = scalar_select 0, %s4, %s2
  $region1: #{tpu_custom_call.1} parent=0
    #allocation2 [shape = 'u8[8192]{0}', space=vmem, size = 0x2000, scoped, tag = 'input window, operand 0, single buffered']
    #allocation3 [shape = 's32[1]{0}', space=sflag, size = 0x4, scoped, tag = 'scoped memory for tpu_custom_call.1']
    #allocation4 [shape = 's32[1]{0}', space=sflag, size = 0x4, scoped, tag = 'scoped memory for tpu_custom_call.1']
    #allocation5 [shape = 'u8[8192]{0}', space=vmem, size = 0x2000, scoped, tag = 'output window, operand 0, single buffered']
    %6 = vsyncpa [#allocation3], 0
    %7 = vsyncpa [#allocation4], 0
    // Predicated region
    $region2: #{tpu_custom_call.1} parent=1 // pred_check
      _
    $region3: #{tpu_custom_call.1} parent=1 // pred_check_branch
      %9 = sbr.rel (0) target = $region5
    $region4: #{tpu_custom_call.1} parent=1 // pred_region
      %11 = vsyncadd [#allocation3], 0
      %s12 = sshll.u32 %s0, 4
      %s13 = int_to_ptr.hbm [resolvable:$true] %s12
      %s14 = sshll.u32 [#allocation2], 4
      %s15 = int_to_ptr.vmem [resolvable:$true] %s14
      %20 = dma.hbm_to_vmem [thread:$0]  %s13, 256, %s15, [#allocation3], 128, 128, 8
    $region5: #{tpu_custom_call.1} parent=1 // pred_fallthru
      _
    // Predicated region
    $region6: #{tpu_custom_call.1} parent=1 // pred_check
      _
    $region7: #{tpu_custom_call.1} parent=1 // pred_check_branch
      %22 = sbr.rel (0) target = $region9
    $region8: #{tpu_custom_call.1} parent=1 // pred_region
      %24 = dma.done [#allocation3], 256
    $region9: #{tpu_custom_call.1} parent=1 // pred_fallthru
      _
    %v25 = vld [vmem:[#allocation2] sm:$0xff]
    %v26 = vld [vmem:[#allocation2 + $0x8] sm:$0xff]
    %v27 = vmul.f32 %v25, %v25
    %v28 = vmul.f32 %v26, %v26
    %29 = vadd.xlane.f32.xlu0 %v27
    %v30 = vpop.xlane.xlu0 %29
    %31 = vadd.xlane.f32.xlu0 %v28
    %v32 = vpop.xlane.xlu0 %31
    %v33 = vmax.f32 %v30, 1e-24
    %v34 = vmax.f32 %v32, 1e-24
    %v35 = vrsqrt.pop %v33
    %v36 = vmul.f32 %v35, %v33
    %v37 = vmul.f32 %v36, %v35
    %v38 = vmul.f32 0.5, %v37
    %v39 = vsub.f32 1.5, %v38
    %v40 = vmul.f32 %v35, %v39
    %vm41 = vweird.f32 %v33
    %vm42 = vweird.f32 %v35
    %vm43 = vmor %vm41, %vm42
    %v44 = vsel %vm43, %v35, %v40
    %v45 = vrsqrt.pop %v34
    %v46 = vmul.f32 %v45, %v34
    %v47 = vmul.f32 %v46, %v45
    %v48 = vmul.f32 0.5, %v47
    %v49 = vsub.f32 1.5, %v48
    %v50 = vmul.f32 %v45, %v49
    %vm51 = vweird.f32 %v34
    %vm52 = vweird.f32 %v45
    %vm53 = vmor %vm51, %vm52
    %v54 = vsel %vm53, %v45, %v50
    %v55 = vmul.f32 %v44, 11.313708
    %v56 = vmul.f32 %v54, 11.313708
    %v57 = vmul.f32 %v25, %v55
    %v58 = vmul.f32 %v26, %v56
    %59 = vst [vmem:[#allocation5] sm:$0xff] %v57
    %60 = vst [vmem:[#allocation5 + $0x8] sm:$0xff] %v58
    // Predicated region
    $region10: #{tpu_custom_call.1} parent=1 // pred_check
      _
    $region11: #{tpu_custom_call.1} parent=1 // pred_check_branch
      %62 = sbr.rel (0) target = $region13
    $region12: #{tpu_custom_call.1} parent=1 // pred_region
      %64 = vsyncadd [#allocation4], 0
      %s65 = sshll.u32 [#allocation5], 4
      %s66 = int_to_ptr.vmem [resolvable:$true] %s65
      %s67 = sshll.u32 %s1, 4
      %s68 = int_to_ptr.hbm [resolvable:$true] %s67
      %73 = dma.vmem_to_hbm [thread:$0]  %s66, 256, %s68, [#allocation4], 128, 128, 8
    $region13: #{tpu_custom_call.1} parent=1 // pred_fallthru
      _
    // Predicated region
    $region14: #{tpu_custom_call.1} parent=1 // pred_check
      _
    $region15: #{tpu_custom_call.1} parent=1 // pred_check_branch
      %75 = sbr.rel (0) target = $region17
    $region16: #{tpu_custom_call.1} parent=1 // pred_region
      %77 = dma.done [#allocation4], 256
    $region17: #{tpu_custom_call.1} parent=1 // pred_fallthru
      _
    %78 = vsyncpa [#allocation3], 1
    %79 = vsyncpa [#allocation4], 1

</llo_original>
